<compile_context>
chip_gen: v5e
topology: v5e:2x2
jax: 0.10.0
libtpu: 0.0.40
codegen_flags: <defaults>
</compile_context>

<pallas_src>
import jax
import jax.numpy as jnp
import numpy as np
from jax.experimental import pallas as pl
from jax.experimental.pallas import tpu as pltpu


def _round_up(x, m):
    return ((x + m - 1) // m) * m


def soft_attention_kernel(v_ref, q_ref, wv_ref, bv_ref, wq_ref, bq_ref,
                          wl_ref, out_ref):
    tb, k, v_dim = v_ref.shape
    num_hid = wv_ref.shape[-1]

    # --- FCNet projections: one large MXU push each (M = tb*k and M = tb) ---
    v_flat = v_ref[...].reshape(tb * k, v_dim)                         # (tb*k, v_dim)
    v_proj = jnp.maximum(
        jnp.dot(v_flat, wv_ref[...], preferred_element_type=jnp.float32)
        + bv_ref[...], 0.0)                                            # (tb*k, num_hid) f32
    q_proj = jnp.maximum(
        jnp.dot(q_ref[...], wq_ref[...], preferred_element_type=jnp.float32)
        + bq_ref[...], 0.0)                                            # (tb, num_hid) f32

    # joint representation, broadcast q_proj over the k regions
    joint = v_proj.reshape(tb, k, num_hid) * q_proj[:, None, :]        # (tb, k, num_hid)
    # dropout(p=0.2) is identity at inference time (eval mode: no scaling)

    # final Linear(num_hid -> 1) as a lane reduction (XLU), not an N=1 matmul.
    # Scalar bias bl is dropped: softmax over k is shift-invariant (exact).
    wl_row = wl_ref[...].reshape(1, 1, num_hid)
    logits = jnp.sum(joint * wl_row, axis=-1)                          # (tb, k)

    # softmax over the k (lane) axis
    m = jnp.max(logits, axis=-1, keepdims=True)
    e = jnp.exp(logits - m)
    s = jnp.sum(e, axis=-1, keepdims=True)
    out_ref[...] = (e * pl.reciprocal(s, approx=True)).astype(out_ref.dtype)


def soft_attention(v, q, params, *, block_b=128, mxu_dtype=None):
    """v: (batch, k, v_dim), q: (batch, q_dim) -> attention weights (batch, k, 1)."""
    batch, k, v_dim = v.shape
    q_dim = q.shape[-1]
    num_hid = params["wv"].shape[1]

    wv, wq = params["wv"], params["wq"]
    if mxu_dtype is not None:              # e.g. jnp.bfloat16 on v6e/v7x production sizes
        v, q = v.astype(mxu_dtype), q.astype(mxu_dtype)
        wv, wq = wv.astype(mxu_dtype), wq.astype(mxu_dtype)

    # Batch tile: many examples per grid step; multiple of 8 for sublane alignment.
    # (At block_b=128 the per-step VMEM footprint is tiny, so the default scoped
    #  VMEM limit is fine even on v7x's 64 MiB.)
    tb = min(block_b, _round_up(batch, 8))
    batch_p = _round_up(batch, tb)
    if batch_p != batch:
        v = jnp.pad(v, ((0, batch_p - batch), (0, 0), (0, 0)))
        q = jnp.pad(q, ((0, batch_p - batch), (0, 0)))

    wl_row = params["wl"].reshape(1, num_hid).astype(jnp.float32)

    out2d = pl.pallas_call(
        soft_attention_kernel,
        out_shape=jax.ShapeDtypeStruct((batch_p, k), jnp.float32),
        grid_spec=pltpu.PrefetchScalarGridSpec(
            num_scalar_prefetch=0,
            grid=(batch_p // tb,),
            in_specs=[
                pl.BlockSpec((tb, k, v_dim), lambda b: (b, 0, 0)),     # v   (per-step tile)
                pl.BlockSpec((tb, q_dim), lambda b: (b, 0)),           # q   (per-step tile)
                pl.BlockSpec((v_dim, num_hid), lambda b: (0, 0)),      # Wv  (resident)
                pl.BlockSpec((1, num_hid), lambda b: (0, 0)),          # bv  (resident)
                pl.BlockSpec((q_dim, num_hid), lambda b: (0, 0)),      # Wq  (resident)
                pl.BlockSpec((1, num_hid), lambda b: (0, 0)),          # bq  (resident)
                pl.BlockSpec((1, num_hid), lambda b: (0, 0)),          # W_linear row
            ],
            out_specs=pl.BlockSpec((tb, k), lambda b: (b, 0)),         # lane-dense (k on lanes)
        ),
        compiler_params=pltpu.CompilerParams(
            dimension_semantics=("parallel",)),
    )(v, q, wv, params["bv"], wq, params["bq"], wl_row)

    return out2d[:batch].reshape(batch, k, 1)


def _weight_norm(w_raw, g):
    # weight_norm(..., dim=None): W = g * V / ||V||_F (g is a scalar)
    return g * w_raw / jnp.sqrt(jnp.sum(w_raw * w_raw))


def init_params(key, v_dim, q_dim, num_hid):
    ks = jax.random.split(key, 6)

    def linear_init(kw, kb, fan_in, fan_out):
        bound = 1.0 / np.sqrt(fan_in)
        w = jax.random.uniform(kw, (fan_in, fan_out), jnp.float32, -bound, bound)
        b = jax.random.uniform(kb, (1, fan_out), jnp.float32, -bound, bound)
        return w, b

    wv_raw, bv = linear_init(ks[0], ks[1], v_dim, num_hid)
    wq_raw, bq = linear_init(ks[2], ks[3], q_dim, num_hid)
    wl_raw, bl = linear_init(ks[4], ks[5], num_hid, 1)

    # PyTorch weight_norm initializes g = ||V||_F; keep the explicit fold anyway.
    return {
        "wv": _weight_norm(wv_raw, jnp.sqrt(jnp.sum(wv_raw * wv_raw))),
        "bv": bv,
        "wq": _weight_norm(wq_raw, jnp.sqrt(jnp.sum(wq_raw * wq_raw))),
        "bq": bq,
        "wl": _weight_norm(wl_raw, jnp.sqrt(jnp.sum(wl_raw * wl_raw))),
        "bl": bl,   # kept for the reference; not used in-kernel (softmax shift-invariant)
    }


def soft_attention_ref(v, q, params):
    vp = jax.nn.relu(v @ params["wv"] + params["bv"])
    qp = jax.nn.relu(q @ params["wq"] + params["bq"])[:, None, :]
    logits = (vp * qp) @ params["wl"] + params["bl"]
    return jax.nn.softmax(logits, axis=1)


if __name__ == "__main__":
    batch, k, v_dim, q_dim = 2, 8, 16, 32
    num_hid = q_dim  # module's final Linear(q_dim, 1) requires num_hid == q_dim

    key = jax.random.PRNGKey(0)
    kv, kq, kp = jax.random.split(key, 3)
    v = jax.random.normal(kv, (batch, k, v_dim), jnp.float32)
    q = jax.random.normal(kq, (batch, q_dim), jnp.float32)
    params = init_params(kp, v_dim, q_dim, num_hid)

    # f32 MXU inputs at this tiny test size; pass mxu_dtype=jnp.bfloat16 on v6e/v7x
    # at production sizes for 2x MXU throughput / half the weight+activation bytes.
    out = soft_attention(v, q, params)
    out = jax.block_until_ready(out)

    ref = soft_attention_ref(v, q, params)
    # tolerance loosened slightly for the approx (EUP) reciprocal in the softmax epilogue
    np.testing.assert_allclose(np.asarray(out), np.asarray(ref), rtol=2e-3, atol=2e-3)
    print("KERNEL_OK")
</pallas_src>

<mosaic_0001>
module attributes {stable_mosaic.version = 11 : i64} {
  func.func @soft_attention_kernel(%arg0: i32, %arg1: memref<8x8x16xf32, #tpu.memory_space<vmem>>, %arg2: memref<8x32xf32, #tpu.memory_space<vmem>>, %arg3: memref<16x32xf32, #tpu.memory_space<vmem>>, %arg4: memref<1x32xf32, #tpu.memory_space<vmem>>, %arg5: memref<32x32xf32, #tpu.memory_space<vmem>>, %arg6: memref<1x32xf32, #tpu.memory_space<vmem>>, %arg7: memref<1x32xf32, #tpu.memory_space<vmem>>, %arg8: memref<8x8xf32, #tpu.memory_space<vmem>>) attributes {dimension_semantics = [#tpu.dimension_semantics<parallel>], iteration_bounds = array<i64: 1>, scalar_prefetch = 0 : i64, scratch_operands = 0 : i64, tpu.core_type = #tpu.core_type<tc>, window_params = [{transform_indices = @transform_0, window_bounds = array<i64: 8, 8, 16>}, {transform_indices = @transform_1, window_bounds = array<i64: 8, 32>}, {pipeline_mode = #tpu.pipeline_mode<synchronous>, transform_indices = @transform_2, window_bounds = array<i64: 16, 32>}, {pipeline_mode = #tpu.pipeline_mode<synchronous>, transform_indices = @transform_3, window_bounds = array<i64: 1, 32>}, {pipeline_mode = #tpu.pipeline_mode<synchronous>, transform_indices = @transform_4, window_bounds = array<i64: 32, 32>}, {pipeline_mode = #tpu.pipeline_mode<synchronous>, transform_indices = @transform_5, window_bounds = array<i64: 1, 32>}, {pipeline_mode = #tpu.pipeline_mode<synchronous>, transform_indices = @transform_6, window_bounds = array<i64: 1, 32>}, {transform_indices = @transform_7, window_bounds = array<i64: 8, 8>}]} {
    %c0 = arith.constant 0 : index
    %c0_0 = arith.constant 0 : index
    %c0_1 = arith.constant 0 : index
    %0 = vector.load %arg1[%c0, %c0_0, %c0_1] : memref<8x8x16xf32, #tpu.memory_space<vmem>>, vector<8x8x16xf32>
    %1 = vector.shape_cast %0 : vector<8x8x16xf32> to vector<64x16xf32>
    %c0_2 = arith.constant 0 : index
    %c0_3 = arith.constant 0 : index
    %2 = vector.load %arg3[%c0_2, %c0_3] : memref<16x32xf32, #tpu.memory_space<vmem>>, vector<16x32xf32>
    %cst = arith.constant dense<0.000000e+00> : vector<64x32xf32>
    %3 = tpu.matmul %1, %2, %cst {dimension_numbers = #tpu.dot_dimension_numbers<[1], [0], [0], [1], [0, 0, 1, 1], [], []>} : vector<64x16xf32>, vector<16x32xf32>, vector<64x32xf32> -> vector<64x32xf32>
    %c0_4 = arith.constant 0 : index
    %c0_5 = arith.constant 0 : index
    %4 = vector.load %arg4[%c0_4, %c0_5] : memref<1x32xf32, #tpu.memory_space<vmem>>, vector<1x32xf32>
    %5 = vector.broadcast %4 : vector<1x32xf32> to vector<64x32xf32>
    %6 = arith.addf %3, %5 : vector<64x32xf32>
    %cst_6 = arith.constant 0.000000e+00 : f32
    %7 = vector.broadcast %cst_6 : f32 to vector<64x32xf32>
    %8 = arith.maximumf %6, %7 : vector<64x32xf32>
    %c0_7 = arith.constant 0 : index
    %c0_8 = arith.constant 0 : index
    %9 = vector.load %arg2[%c0_7, %c0_8] : memref<8x32xf32, #tpu.memory_space<vmem>>, vector<8x32xf32>
    %c0_9 = arith.constant 0 : index
    %c0_10 = arith.constant 0 : index
    %10 = vector.load %arg5[%c0_9, %c0_10] : memref<32x32xf32, #tpu.memory_space<vmem>>, vector<32x32xf32>
    %cst_11 = arith.constant dense<0.000000e+00> : vector<8x32xf32>
    %11 = tpu.matmul %9, %10, %cst_11 {dimension_numbers = #tpu.dot_dimension_numbers<[1], [0], [0], [1], [0, 0, 1, 1], [], []>} : vector<8x32xf32>, vector<32x32xf32>, vector<8x32xf32> -> vector<8x32xf32>
    %c0_12 = arith.constant 0 : index
    %c0_13 = arith.constant 0 : index
    %12 = vector.load %arg6[%c0_12, %c0_13] : memref<1x32xf32, #tpu.memory_space<vmem>>, vector<1x32xf32>
    %13 = vector.broadcast %12 : vector<1x32xf32> to vector<8x32xf32>
    %14 = arith.addf %11, %13 : vector<8x32xf32>
    %cst_14 = arith.constant 0.000000e+00 : f32
    %15 = vector.broadcast %cst_14 : f32 to vector<8x32xf32>
    %16 = arith.maximumf %14, %15 : vector<8x32xf32>
    %17 = vector.shape_cast %8 : vector<64x32xf32> to vector<8x8x32xf32>
    %18 = vector.shape_cast %16 : vector<8x32xf32> to vector<8x1x32xf32>
    %19 = vector.broadcast %18 : vector<8x1x32xf32> to vector<8x8x32xf32>
    %20 = arith.mulf %17, %19 : vector<8x8x32xf32>
    %c0_15 = arith.constant 0 : index
    %c0_16 = arith.constant 0 : index
    %21 = vector.load %arg7[%c0_15, %c0_16] : memref<1x32xf32, #tpu.memory_space<vmem>>, vector<1x32xf32>
    %22 = vector.shape_cast %21 : vector<1x32xf32> to vector<1x1x32xf32>
    %23 = vector.broadcast %22 : vector<1x1x32xf32> to vector<8x8x32xf32>
    %24 = arith.mulf %20, %23 : vector<8x8x32xf32>
    %cst_17 = arith.constant dense<0.000000e+00> : vector<8x8xf32>
    %25 = vector.multi_reduction <add>, %24, %cst_17 [2] : vector<8x8x32xf32> to vector<8x8xf32>
    %cst_18 = arith.constant dense<0xFF800000> : vector<8xf32>
    %26 = vector.multi_reduction <maximumf>, %25, %cst_18 [1] : vector<8x8xf32> to vector<8xf32>
    %27 = vector.shape_cast %26 : vector<8xf32> to vector<8x1xf32>
    %28 = vector.broadcast %27 : vector<8x1xf32> to vector<8x8xf32>
    %29 = arith.subf %25, %28 : vector<8x8xf32>
    %30 = math.exp %29 : vector<8x8xf32>
    %cst_19 = arith.constant dense<0.000000e+00> : vector<8xf32>
    %31 = vector.multi_reduction <add>, %30, %cst_19 [1] : vector<8x8xf32> to vector<8xf32>
    %32 = vector.shape_cast %31 : vector<8xf32> to vector<8x1xf32>
    %33 = tpu.reciprocal %32 {approx = true} : vector<8x1xf32> -> vector<8x1xf32>
    %34 = vector.broadcast %33 : vector<8x1xf32> to vector<8x8xf32>
    %35 = arith.mulf %30, %34 : vector<8x8xf32>
    %c0_20 = arith.constant 0 : index
    %c0_21 = arith.constant 0 : index
    %36 = vector.load %arg8[%c0_20, %c0_21] : memref<8x8xf32, #tpu.memory_space<vmem>>, vector<8x8xf32>
    tpu.vector_store %arg8[%c0_20, %c0_21], %35 {strides = array<i32>} : memref<8x8xf32, #tpu.memory_space<vmem>>, vector<8x8xf32>,
    return
  }
  func.func @transform_0(%arg0: i32) -> (i32, i32, i32) {
    %c0_i32 = arith.constant 0 : i32
    %c0_i32_0 = arith.constant 0 : i32
    %c0_i32_1 = arith.constant 0 : i32
    return %arg0, %c0_i32, %c0_i32_0 : i32, i32, i32
  }
  func.func @transform_1(%arg0: i32) -> (i32, i32) {
    %c0_i32 = arith.constant 0 : i32
    %c0_i32_0 = arith.constant 0 : i32
    return %arg0, %c0_i32 : i32, i32
  }
  func.func @transform_2(%arg0: i32) -> (i32, i32) {
    %c0_i32 = arith.constant 0 : i32
    %c0_i32_0 = arith.constant 0 : i32
    %c0_i32_1 = arith.constant 0 : i32
    return %c0_i32, %c0_i32_0 : i32, i32
  }
  func.func @transform_3(%arg0: i32) -> (i32, i32) {
    %c0_i32 = arith.constant 0 : i32
    %c0_i32_0 = arith.constant 0 : i32
    %c0_i32_1 = arith.constant 0 : i32
    return %c0_i32, %c0_i32_0 : i32, i32
  }
  func.func @transform_4(%arg0: i32) -> (i32, i32) {
    %c0_i32 = arith.constant 0 : i32
    %c0_i32_0 = arith.constant 0 : i32
    %c0_i32_1 = arith.constant 0 : i32
    return %c0_i32, %c0_i32_0 : i32, i32
  }
  func.func @transform_5(%arg0: i32) -> (i32, i32) {
    %c0_i32 = arith.constant 0 : i32
    %c0_i32_0 = arith.constant 0 : i32
    %c0_i32_1 = arith.constant 0 : i32
    return %c0_i32, %c0_i32_0 : i32, i32
  }
  func.func @transform_6(%arg0: i32) -> (i32, i32) {
    %c0_i32 = arith.constant 0 : i32
    %c0_i32_0 = arith.constant 0 : i32
    %c0_i32_1 = arith.constant 0 : i32
    return %c0_i32, %c0_i32_0 : i32, i32
  }
  func.func @transform_7(%arg0: i32) -> (i32, i32) {
    %c0_i32 = arith.constant 0 : i32
    %c0_i32_0 = arith.constant 0 : i32
    return %arg0, %c0_i32 : i32, i32
  }
}

</mosaic_0001>

<llo_original>
// kernel: tpu_custom_call.1
$region0: #{tpu_custom_call.1}
  #allocation0 [shape = 'u32[]', space=smem, size = 0x4, offset = 0x4, fixed_abs, tag = 'smem constant byte address 0x4 - core index']
  #allocation1 [shape = 'u32[72,128]{1,0:T(1,128)}', space=vmem, size = 0x9000, scoped, tag = 'internal scratch']
  %s0 = inlined_call_operand.hbm [shape: f32[8,8,16], index: 0, kind: input, shape index: {}]
  %s1 = inlined_call_operand.hbm [shape: f32[8,32], index: 1, kind: input, shape index: {}]
  %s2 = inlined_call_operand.hbm [shape: f32[16,32], index: 2, kind: input, shape index: {}]
  %s3 = inlined_call_operand.vmem [shape: f32[1,32], index: 3, kind: input, shape index: {}]
  %s4 = inlined_call_operand.hbm [shape: f32[32,32], index: 4, kind: input, shape index: {}]
  %s5 = inlined_call_operand.vmem [shape: f32[1,32], index: 5, kind: input, shape index: {}]
  %s6 = inlined_call_operand.vmem [shape: f32[1,32], index: 6, kind: input, shape index: {}]
  %s7 = inlined_call_operand.hbm [shape: f32[8,8], index: 7, kind: output, shape index: {}]
  %s8 = sld [smem:[#allocation0]]
  $region54: #{tpu_custom_call.1} parent=0
    _
  %s10 = ssub.s32 1, %s8
  %s11 = scalar_select 0, %s10, %s8
  $region1: #{tpu_custom_call.1} parent=0
    #allocation2 [shape = 'u8[32768]{0}', space=vmem, size = 0x8000, scoped, tag = 'input window, operand 0, single buffered']
    #allocation3 [shape = 's32[1]{0}', space=sflag, size = 0x4, scoped, tag = 'scoped memory for tpu_custom_call.1']
    #allocation4 [shape = 's32[1]{0}', space=sflag, size = 0x4, scoped, tag = 'scoped memory for tpu_custom_call.1']
    #allocation5 [shape = 'u8[4096]{0}', space=vmem, size = 0x1000, scoped, tag = 'input window, operand 1, single buffered']
    #allocation6 [shape = 's32[1]{0}', space=sflag, size = 0x4, scoped, tag = 'scoped memory for tpu_custom_call.1']
    #allocation7 [shape = 'u8[8192]{0}', space=vmem, size = 0x2000, scoped, tag = 'input window, operand 2, single buffered']
    #allocation8 [shape = 'u8[16384]{0}', space=vmem, size = 0x4000, scoped, tag = 'input window, operand 4, single buffered']
    #allocation9 [shape = 's32[1]{0}', space=sflag, size = 0x4, scoped, tag = 'scoped memory for tpu_custom_call.1']
    #allocation10 [shape = 'u8[4096]{0}', space=vmem, size = 0x1000, scoped, tag = 'output window, operand 0, single buffered']
    %12 = vsyncpa [#allocation3], 0
    %13 = vsyncpa [#allocation6], 0
    %14 = vsyncpa [#allocation9], 0
    %15 = vsyncpa [#allocation4], 0
    // Predicated region
    $region2: #{tpu_custom_call.1} parent=1 // pred_check
      _
    $region3: #{tpu_custom_call.1} parent=1 // pred_check_branch
      %17 = sbr.rel (0) target = $region5
    $region4: #{tpu_custom_call.1} parent=1 // pred_region
      %19 = vsyncadd [#allocation3], 0
      %s20 = sshll.u32 %s0, 4
      %s21 = int_to_ptr.hbm [resolvable:$true] %s20
      %s22 = sshll.u32 [#allocation2], 4
      %s23 = int_to_ptr.vmem [resolvable:$true] %s22
      %28 = dma.hbm_to_vmem [thread:$0]  %s21, 1024, %s23, [#allocation3], 128, 128, 8
    $region5: #{tpu_custom_call.1} parent=1 // pred_fallthru
      _
    // Predicated region
    $region6: #{tpu_custom_call.1} parent=1 // pred_check
      _
    $region7: #{tpu_custom_call.1} parent=1 // pred_check_branch
      %30 = sbr.rel (0) target = $region9
    $region8: #{tpu_custom_call.1} parent=1 // pred_region
      %32 = vsyncadd [#allocation6], 0
      %s34 = sshll.u32 %s1, 4
      %s35 = int_to_ptr.hbm [resolvable:$true] %s34
      %s36 = sshll.u32 [#allocation5], 4
      %s37 = int_to_ptr.vmem [resolvable:$true] %s36
      %39 = dma.hbm_to_vmem [thread:$0]  %s35, 128, %s37, [#allocation6]
    $region9: #{tpu_custom_call.1} parent=1 // pred_fallthru
      _
    // Predicated region
    $region10: #{tpu_custom_call.1} parent=1 // pred_check
      _
    $region11: #{tpu_custom_call.1} parent=1 // pred_check_branch
      %41 = sbr.rel (0) target = $region13
    $region12: #{tpu_custom_call.1} parent=1 // pred_region
      %43 = vsyncadd [#allocation6], 0
      %s44 = sshll.u32 %s2, 4
      %s45 = int_to_ptr.hbm [resolvable:$true] %s44
      %s46 = sshll.u32 [#allocation7], 4
      %s47 = int_to_ptr.vmem [resolvable:$true] %s46
      %52 = dma.hbm_to_vmem [thread:$0]  %s45, 256, %s47, [#allocation6], 128, 128, 8
    $region13: #{tpu_custom_call.1} parent=1 // pred_fallthru
      _
    // Predicated region
    $region14: #{tpu_custom_call.1} parent=1 // pred_check
      _
    $region15: #{tpu_custom_call.1} parent=1 // pred_check_branch
      %54 = sbr.rel (0) target = $region17
    $region16: #{tpu_custom_call.1} parent=1 // pred_region
      _
    $region17: #{tpu_custom_call.1} parent=1 // pred_fallthru
      _
    // Predicated region
    $region18: #{tpu_custom_call.1} parent=1 // pred_check
      _
    $region19: #{tpu_custom_call.1} parent=1 // pred_check_branch
      %56 = sbr.rel (0) target = $region21
    $region20: #{tpu_custom_call.1} parent=1 // pred_region
      %58 = vsyncadd [#allocation9], 0
      %s59 = sshll.u32 %s4, 4
      %s60 = int_to_ptr.hbm [resolvable:$true] %s59
      %s61 = sshll.u32 [#allocation8], 4
      %s62 = int_to_ptr.vmem [resolvable:$true] %s61
      %67 = dma.hbm_to_vmem [thread:$0]  %s60, 512, %s62, [#allocation9], 128, 128, 8
    $region21: #{tpu_custom_call.1} parent=1 // pred_fallthru
      _
    // Predicated region
    $region22: #{tpu_custom_call.1} parent=1 // pred_check
      _
    $region23: #{tpu_custom_call.1} parent=1 // pred_check_branch
      %69 = sbr.rel (0) target = $region25
    $region24: #{tpu_custom_call.1} parent=1 // pred_region
      _
    $region25: #{tpu_custom_call.1} parent=1 // pred_fallthru
      _
    // Predicated region
    $region26: #{tpu_custom_call.1} parent=1 // pred_check
      _
    $region27: #{tpu_custom_call.1} parent=1 // pred_check_branch
      %71 = sbr.rel (0) target = $region29
    $region28: #{tpu_custom_call.1} parent=1 // pred_region
      _
    $region29: #{tpu_custom_call.1} parent=1 // pred_fallthru
      _
    // Predicated region
    $region30: #{tpu_custom_call.1} parent=1 // pred_check
      _
    $region31: #{tpu_custom_call.1} parent=1 // pred_check_branch
      %73 = sbr.rel (0) target = $region33
    $region32: #{tpu_custom_call.1} parent=1 // pred_region
      %75 = dma.done [#allocation3], 1024
    $region33: #{tpu_custom_call.1} parent=1 // pred_fallthru
      _
    // Predicated region
    $region34: #{tpu_custom_call.1} parent=1 // pred_check
      _
    $region35: #{tpu_custom_call.1} parent=1 // pred_check_branch
      %77 = sbr.rel (0) target = $region37
    $region36: #{tpu_custom_call.1} parent=1 // pred_region
      %79 = dma.done [#allocation6], 128
    $region37: #{tpu_custom_call.1} parent=1 // pred_fallthru
      _
    // Predicated region
    $region38: #{tpu_custom_call.1} parent=1 // pred_check
      _
    $region39: #{tpu_custom_call.1} parent=1 // pred_check_branch
      %81 = sbr.rel (0) target = $region41
    $region40: #{tpu_custom_call.1} parent=1 // pred_region
      %83 = dma.done [#allocation6], 256
    $region41: #{tpu_custom_call.1} parent=1 // pred_fallthru
      _
    // Predicated region
    $region42: #{tpu_custom_call.1} parent=1 // pred_check
      _
    $region43: #{tpu_custom_call.1} parent=1 // pred_check_branch
      %85 = sbr.rel (0) target = $region45
    $region44: #{tpu_custom_call.1} parent=1 // pred_region
      %87 = dma.done [#allocation9], 512
    $region45: #{tpu_custom_call.1} parent=1 // pred_fallthru
      _
    %v88 = vld [vmem:[#allocation2] sm:$0xff]
    %v89 = vld [vmem:[#allocation2 + $0x8] sm:$0xff]
    %v90 = vld [vmem:[#allocation2 + $0x10] sm:$0xff]
    %v91 = vld [vmem:[#allocation2 + $0x18] sm:$0xff]
    %v92 = vld [vmem:[#allocation2 + $0x20] sm:$0xff]
    %v93 = vld [vmem:[#allocation2 + $0x28] sm:$0xff]
    %v94 = vld [vmem:[#allocation2 + $0x30] sm:$0xff]
    %v95 = vld [vmem:[#allocation2 + $0x38] sm:$0xff]
    %v96 = vld [vmem:[#allocation7] sm:$0xff]
    %v97 = vld [vmem:[#allocation7 + $0x8] sm:$0xff]
    %v98 = vld [vmem:[%s3] sm:$0x1]
    %v100 = vperm.slane %v98, 0
    %vm102 = vcmask 130048
    %v104 = vsel %vm102, %v88, 0
    %v107 = vsel %vm102, %v89, 0
    %v110 = vsel %vm102, %v90, 0
    %v113 = vsel %vm102, %v91, 0
    %v116 = vsel %vm102, %v92, 0
    %v119 = vsel %vm102, %v93, 0
    %v122 = vsel %vm102, %v94, 0
    %v125 = vsel %vm102, %v95, 0
    %127 = vmatpush.msra.mxu0 0.0
    %128 = vmatpush.msra.mxu0 0.0
    %129 = vmatpush.msra.mxu0 0.0
    %130 = vmatpush.msra.mxu0 0.0
    %131 = vmatpush.msra.mxu0 0.0
    %132 = vmatpush.msra.mxu0 0.0
    %133 = vmatpush.msra.mxu0 0.0
    %134 = vmatpush.msra.mxu0 0.0
    %135 = vmatpush.msra.mxu0 0.0
    %136 = vmatpush.msra.mxu0 0.0
    %137 = vmatpush.msra.mxu0 0.0
    %138 = vmatpush.msra.mxu0 0.0
    %139 = vmatpush.msra.mxu0 0.0
    %140 = vmatpush.msra.mxu0 0.0
    %141 = vmatpush.msra.mxu0 %v97
    %142 = vmatpush.msra.mxu0 %v96
    %143 = vmatmul.f32.gmra.mxu0 %v104
    %v144 = vpop.f32.mrf.mxu0
    %v145 = vadd.f32 %v100, %v144
    %146 = vmatmul.f32.gmra.mxu0 %v107
    %v147 = vpop.f32.mrf.mxu0
    %v148 = vadd.f32 %v100, %v147
    %149 = vmatmul.f32.gmra.mxu0 %v110
    %v150 = vpop.f32.mrf.mxu0
    %v151 = vadd.f32 %v100, %v150
    %152 = vmatmul.f32.gmra.mxu0 %v113
    %v153 = vpop.f32.mrf.mxu0
    %v154 = vadd.f32 %v100, %v153
    %155 = vmatmul.f32.gmra.mxu0 %v116
    %v156 = vpop.f32.mrf.mxu0
    %v157 = vadd.f32 %v100, %v156
    %158 = vmatmul.f32.gmra.mxu0 %v119
    %v159 = vpop.f32.mrf.mxu0
    %v160 = vadd.f32 %v100, %v159
    %161 = vmatmul.f32.gmra.mxu0 %v122
    %v162 = vpop.f32.mrf.mxu0
    %v163 = vadd.f32 %v100, %v162
    %164 = vmatmul.f32.gmra.mxu0 %v125
    %v165 = vpop.f32.mrf.mxu0
    %v166 = vadd.f32 %v100, %v165
    %167 = vdwg.mxu0
    %v168 = vmax.f32 %v145, 0.0
    %v169 = vmax.f32 %v148, 0.0
    %v170 = vmax.f32 %v151, 0.0
    %v171 = vmax.f32 %v154, 0.0
    %v172 = vmax.f32 %v157, 0.0
    %v173 = vmax.f32 %v160, 0.0
    %v174 = vmax.f32 %v163, 0.0
    %v175 = vmax.f32 %v166, 0.0
    %v176 = vld [vmem:[#allocation5] sm:$0xff]
    %v177 = vld [vmem:[#allocation8] sm:$0xff]
    %v178 = vld [vmem:[#allocation8 + $0x8] sm:$0xff]
    %v179 = vld [vmem:[#allocation8 + $0x10] sm:$0xff]
    %v180 = vld [vmem:[#allocation8 + $0x18] sm:$0xff]
    %v181 = vld [vmem:[%s5] sm:$0x1]
    %v183 = vperm.slane %v181, 0
    %vm185 = vcmask 261120
    %v187 = vsel %vm185, %v176, 0
    %189 = vmatpush.msra.mxu0 0.0
    %190 = vmatpush.msra.mxu0 0.0
    %191 = vmatpush.msra.mxu0 0.0
    %192 = vmatpush.msra.mxu0 0.0
    %193 = vmatpush.msra.mxu0 0.0
    %194 = vmatpush.msra.mxu0 0.0
    %195 = vmatpush.msra.mxu0 0.0
    %196 = vmatpush.msra.mxu0 0.0
    %197 = vmatpush.msra.mxu0 0.0
    %198 = vmatpush.msra.mxu0 0.0
    %199 = vmatpush.msra.mxu0 0.0
    %200 = vmatpush.msra.mxu0 0.0
    %201 = vmatpush.msra.mxu0 %v180
    %202 = vmatpush.msra.mxu0 %v179
    %203 = vmatpush.msra.mxu0 %v178
    %204 = vmatpush.msra.mxu0 %v177
    %205 = vmatmul.f32.gmra.mxu0 %v187
    %v206 = vpop.f32.mrf.mxu0
    %v207 = vadd.f32 %v183, %v206
    %208 = vdwg.mxu0
    %v209 = vmax.f32 %v207, 0.0
    %v211 = vrot.slane %v209, 1
    %v212 = vrot.slane %v209, 2
    %v213 = vrot.slane %v209, 3
    %v214 = vrot.slane %v209, 4
    %v215 = vrot.slane %v209, 5
    %v216 = vrot.slane %v209, 6
    %v217 = vrot.slane %v209, 7
    %v218 = vperm.slane %v209, 0
    %v219 = vperm.slane %v211, 0
    %v220 = vperm.slane %v212, 0
    %v221 = vperm.slane %v213, 0
    %v222 = vperm.slane %v214, 0
    %v223 = vperm.slane %v215, 0
    %v224 = vperm.slane %v216, 0
    %v225 = vperm.slane %v217, 0
    %v234 = vmul.f32 %v168, %v218
    %v235 = vmul.f32 %v169, %v219
    %v236 = vmul.f32 %v170, %v220
    %v237 = vmul.f32 %v171, %v221
    %v238 = vmul.f32 %v172, %v222
    %v239 = vmul.f32 %v173, %v223
    %v240 = vmul.f32 %v174, %v224
    %v241 = vmul.f32 %v175, %v225
    %v242 = vld [vmem:[%s6] sm:$0x1]
    %v244 = vperm.slane %v242, 0
    %v246 = vmul.f32 %v234, %v244
    %v247 = vmul.f32 %v235, %v244
    %v248 = vmul.f32 %v236, %v244
    %v249 = vmul.f32 %v237, %v244
    %v250 = vmul.f32 %v238, %v244
    %v251 = vmul.f32 %v239, %v244
    %v252 = vmul.f32 %v240, %v244
    %v253 = vmul.f32 %v241, %v244
    %v254 = vsel %vm185, %v246, 0.0
    %255 = vadd.xlane.f32.xlu0 %v254
    %v256 = vpop.xlane.xlu0 %255
    %v257 = vsel %vm185, %v247, 0.0
    %258 = vadd.xlane.f32.xlu0 %v257
    %v259 = vpop.xlane.xlu0 %258
    %v260 = vsel %vm185, %v248, 0.0
    %261 = vadd.xlane.f32.xlu0 %v260
    %v262 = vpop.xlane.xlu0 %261
    %v263 = vsel %vm185, %v249, 0.0
    %264 = vadd.xlane.f32.xlu0 %v263
    %v265 = vpop.xlane.xlu0 %264
    %v266 = vsel %vm185, %v250, 0.0
    %267 = vadd.xlane.f32.xlu0 %v266
    %v268 = vpop.xlane.xlu0 %267
    %v269 = vsel %vm185, %v251, 0.0
    %270 = vadd.xlane.f32.xlu0 %v269
    %v271 = vpop.xlane.xlu0 %270
    %v272 = vsel %vm185, %v252, 0.0
    %273 = vadd.xlane.f32.xlu0 %v272
    %v274 = vpop.xlane.xlu0 %273
    %v275 = vsel %vm185, %v253, 0.0
    %276 = vadd.xlane.f32.xlu0 %v275
    %v277 = vpop.xlane.xlu0 %276
    %v286 = vlaneseq
    %v287 = vand.u32 %v286, 127
    %v288 = vperm.slane %v256, %v287
    %v289 = vperm.slane %v259, %v287
    %v290 = vperm.slane %v262, %v287
    %v291 = vperm.slane %v265, %v287
    %v292 = vperm.slane %v268, %v287
    %v293 = vperm.slane %v271, %v287
    %v294 = vperm.slane %v274, %v287
    %v295 = vperm.slane %v277, %v287
    %vm296 = vcmask 1041409
    %v297 = vsel %vm296, %v289, %v288
    %vm298 = vcmask 1042434
    %v299 = vsel %vm298, %v290, %v297
    %vm300 = vcmask 1043459
    %v301 = vsel %vm300, %v291, %v299
    %vm302 = vcmask 1044484
    %v303 = vsel %vm302, %v292, %v301
    %vm304 = vcmask 1045509
    %v305 = vsel %vm304, %v293, %v303
    %vm306 = vcmask 1046534
    %v307 = vsel %vm306, %v294, %v305
    %vm308 = vcmask 1047559
    %v309 = vsel %vm308, %v295, %v307
    %vm311 = vcmask 64512
    %v312 = vsel %vm311, %v309, -inf
    %313 = vmax.xlane.f32.xlu0 %v312
    %v314 = vpop.xlane.xlu0 %313
    %v316 = vperm.slane %v314, 0
    %v317 = vperm.slane %v314, 1
    %v318 = vperm.slane %v314, 2
    %v319 = vperm.slane %v314, 3
    %v320 = vperm.slane %v314, 4
    %v321 = vperm.slane %v314, 5
    %v322 = vperm.slane %v314, 6
    %v323 = vperm.slane %v314, 7
    %v332 = vsub.f32 %v256, %v316
    %v333 = vsub.f32 %v259, %v317
    %v334 = vsub.f32 %v262, %v318
    %v335 = vsub.f32 %v265, %v319
    %v336 = vsub.f32 %v268, %v320
    %v337 = vsub.f32 %v271, %v321
    %v338 = vsub.f32 %v274, %v322
    %v339 = vsub.f32 %v277, %v323
    %v340 = vmul.f32 %v332, 1.442695
    %v341 = vpow.pop %v340
    %v342 = vmul.f32 %v333, 1.442695
    %v343 = vpow.pop %v342
    %v344 = vmul.f32 %v334, 1.442695
    %v345 = vpow.pop %v344
    %v346 = vmul.f32 %v335, 1.442695
    %v347 = vpow.pop %v346
    %v348 = vmul.f32 %v336, 1.442695
    %v349 = vpow.pop %v348
    %v350 = vmul.f32 %v337, 1.442695
    %v351 = vpow.pop %v350
    %v352 = vmul.f32 %v338, 1.442695
    %v353 = vpow.pop %v352
    %v354 = vmul.f32 %v339, 1.442695
    %v355 = vpow.pop %v354
    %364 = vset.pattern.permute.xlu0 0
    %365 = vperm.xlu0 %364, %v341
    %v366 = vpop.permute.xlu0 %365
    %367 = vset.pattern.permute.xlu0 0
    %368 = vperm.xlu0 %367, %v343
    %v369 = vpop.permute.xlu0 %368
    %370 = vset.pattern.permute.xlu0 0
    %371 = vperm.xlu0 %370, %v345
    %v372 = vpop.permute.xlu0 %371
    %373 = vset.pattern.permute.xlu0 0
    %374 = vperm.xlu0 %373, %v347
    %v375 = vpop.permute.xlu0 %374
    %376 = vset.pattern.permute.xlu0 0
    %377 = vperm.xlu0 %376, %v349
    %v378 = vpop.permute.xlu0 %377
    %379 = vset.pattern.permute.xlu0 0
    %380 = vperm.xlu0 %379, %v351
    %v381 = vpop.permute.xlu0 %380
    %382 = vset.pattern.permute.xlu0 0
    %383 = vperm.xlu0 %382, %v353
    %v384 = vpop.permute.xlu0 %383
    %385 = vset.pattern.permute.xlu0 0
    %386 = vperm.xlu0 %385, %v355
    %v387 = vpop.permute.xlu0 %386
    %v388 = vperm.slane %v366, %v287
    %v389 = vperm.slane %v369, %v287
    %v390 = vperm.slane %v372, %v287
    %v391 = vperm.slane %v375, %v287
    %v392 = vperm.slane %v378, %v287
    %v393 = vperm.slane %v381, %v287
    %v394 = vperm.slane %v384, %v287
    %v395 = vperm.slane %v387, %v287
    %v396 = vsel %vm296, %v389, %v388
    %v397 = vsel %vm298, %v390, %v396
    %v398 = vsel %vm300, %v391, %v397
    %v399 = vsel %vm302, %v392, %v398
    %v400 = vsel %vm304, %v393, %v399
    %v401 = vsel %vm306, %v394, %v400
    %v402 = vsel %vm308, %v395, %v401
    %v404 = vsel %vm311, %v402, 0.0
    %405 = vadd.xlane.f32.xlu0 %v404
    %v406 = vpop.xlane.xlu0 %405
    %v407 = vrcp.pop %v406
    %v409 = vperm.slane %v407, 0
    %v410 = vperm.slane %v407, 1
    %v411 = vperm.slane %v407, 2
    %v412 = vperm.slane %v407, 3
    %v413 = vperm.slane %v407, 4
    %v414 = vperm.slane %v407, 5
    %v415 = vperm.slane %v407, 6
    %v416 = vperm.slane %v407, 7
    %v425 = vmul.f32 %v341, %v409
    %v426 = vmul.f32 %v343, %v410
    %v427 = vmul.f32 %v345, %v411
    %v428 = vmul.f32 %v347, %v412
    %v429 = vmul.f32 %v349, %v413
    %v430 = vmul.f32 %v351, %v414
    %v431 = vmul.f32 %v353, %v415
    %v432 = vmul.f32 %v355, %v416
    %441 = vset.pattern.permute.xlu0 0
    %442 = vperm.xlu0 %441, %v425
    %v443 = vpop.permute.xlu0 %442
    %444 = vset.pattern.permute.xlu0 0
    %445 = vperm.xlu0 %444, %v426
    %v446 = vpop.permute.xlu0 %445
    %447 = vset.pattern.permute.xlu0 0
    %448 = vperm.xlu0 %447, %v427
    %v449 = vpop.permute.xlu0 %448
    %450 = vset.pattern.permute.xlu0 0
    %451 = vperm.xlu0 %450, %v428
    %v452 = vpop.permute.xlu0 %451
    %453 = vset.pattern.permute.xlu0 0
    %454 = vperm.xlu0 %453, %v429
    %v455 = vpop.permute.xlu0 %454
    %456 = vset.pattern.permute.xlu0 0
    %457 = vperm.xlu0 %456, %v430
    %v458 = vpop.permute.xlu0 %457
    %459 = vset.pattern.permute.xlu0 0
    %460 = vperm.xlu0 %459, %v431
    %v461 = vpop.permute.xlu0 %460
    %462 = vset.pattern.permute.xlu0 0
    %463 = vperm.xlu0 %462, %v432
    %v464 = vpop.permute.xlu0 %463
    %v465 = vperm.slane %v443, %v287
    %v466 = vperm.slane %v446, %v287
    %v467 = vperm.slane %v449, %v287
    %v468 = vperm.slane %v452, %v287
    %v469 = vperm.slane %v455, %v287
    %v470 = vperm.slane %v458, %v287
    %v471 = vperm.slane %v461, %v287
    %v472 = vperm.slane %v464, %v287
    %v473 = vsel %vm296, %v466, %v465
    %v474 = vsel %vm298, %v467, %v473
    %v475 = vsel %vm300, %v468, %v474
    %v476 = vsel %vm302, %v469, %v475
    %v477 = vsel %vm304, %v470, %v476
    %v478 = vsel %vm306, %v471, %v477
    %v479 = vsel %vm308, %v472, %v478
    %481 = vst.msk [vmem:[#allocation10] sm:$0xff] %vm311, %v479
    // Predicated region
    $region46: #{tpu_custom_call.1} parent=1 // pred_check
      _
    $region47: #{tpu_custom_call.1} parent=1 // pred_check_branch
      %483 = sbr.rel (0) target = $region49
    $region48: #{tpu_custom_call.1} parent=1 // pred_region
      %485 = vsyncadd [#allocation4], 0
      %s487 = sshll.u32 [#allocation10], 4
      %s488 = int_to_ptr.vmem [resolvable:$true] %s487
      %s489 = sshll.u32 %s7, 4
      %s490 = int_to_ptr.hbm [resolvable:$true] %s489
      %492 = dma.vmem_to_hbm [thread:$0]  %s488, 128, %s490, [#allocation4]
    $region49: #{tpu_custom_call.1} parent=1 // pred_fallthru
      _
    // Predicated region
    $region50: #{tpu_custom_call.1} parent=1 // pred_check
      _
    $region51: #{tpu_custom_call.1} parent=1 // pred_check_branch
      %494 = sbr.rel (0) target = $region53
    $region52: #{tpu_custom_call.1} parent=1 // pred_region
      %496 = dma.done [#allocation4], 128
    $region53: #{tpu_custom_call.1} parent=1 // pred_fallthru
      _
    %497 = vsyncpa [#allocation3], 1
    %498 = vsyncpa [#allocation6], 1
    %499 = vsyncpa [#allocation9], 1
    %500 = vsyncpa [#allocation4], 1

</llo_original>
